<compile_context>
chip_gen: v6e
topology: v6e:2x2x1
jax: 0.10.0
libtpu: 0.0.40
codegen_flags: <defaults>
</compile_context>

<pallas_src>
import functools

import jax
import jax.numpy as jnp
from jax import lax
from jax.experimental import pallas as pl
from jax.experimental.pallas import tpu as pltpu


def _im2col_3x3(padded, Hp, Wp, Ci):
    """padded: (Hp+2, Wp+2, Ci) value -> (Hp*Wp, 9*Ci) im2col slab.

    Tap order is (dy, dx) row-major with Ci fastest, matching an HWIO weight
    flattened as w.reshape(9*Ci, Co).  The trailing reshape only collapses the
    two leading dims (lane dim unchanged) -> layout no-op when Wp % 8 == 0.
    """
    taps = [padded[dy:dy + Hp, dx:dx + Wp, :]
            for dy in range(3) for dx in range(3)]
    return jnp.concatenate(taps, axis=-1).reshape(Hp * Wp, 9 * Ci)


def _zero_halo(pad_ref, Hp, Wp, C, dtype):
    """Zero only the 1-pixel border of the padded scratch slab.

    The interior is fully rewritten every grid step, so zeroing the whole slab
    is wasted store bandwidth.  Done every step (not gated on program_id==0)
    so it stays correct regardless of megacore grid-step-to-core mapping.
    """
    pad_ref[0:1, :, :] = jnp.zeros((1, Wp + 2, C), dtype)
    pad_ref[Hp + 1:Hp + 2, :, :] = jnp.zeros((1, Wp + 2, C), dtype)
    pad_ref[1:Hp + 1, 0:1, :] = jnp.zeros((Hp, 1, C), dtype)
    pad_ref[1:Hp + 1, Wp + 1:Wp + 2, :] = jnp.zeros((Hp, 1, C), dtype)


def down_kernel(x_ref, w1_ref, b1_ref, w2t_ref, b2_ref, o_ref,
                pad1_ref, pad2_ref, *, compute_dtype):
    # x_ref: (H, Wp, 2*Cin) for one batch element (batch squeezed by BlockSpec).
    H, Wp, two_cin = x_ref.shape
    Cin = two_cin // 2
    Hp = H // 2
    Cmid = w1_ref.shape[-1]

    # ---- MaxPool2d(kernel=2, stride=2) ----
    # H pairs: stride-2 reads on the outermost (non-sublane) axis only.
    # W pairs: already folded into the lane dim by the wrapper reshape.
    top = x_ref[pl.ds(0, Hp, stride=2), :, :]          # rows 0, 2, 4, ...
    bot = x_ref[pl.ds(1, Hp, stride=2), :, :]          # rows 1, 3, 5, ...
    hmax = jnp.maximum(top, bot)                       # (Hp, Wp, 2*Cin)
    pooled = jnp.maximum(hmax[:, :, :Cin],             # even W columns
                         hmax[:, :, Cin:])             # odd  W columns
    # pooled: (Hp, Wp, Cin) in input dtype

    # ---- Conv1 (3x3, pad=1) + bias + ReLU: single im2col matmul ----
    _zero_halo(pad1_ref, Hp, Wp, Cin, compute_dtype)
    pad1_ref[1:Hp + 1, 1:Wp + 1, :] = pooled.astype(compute_dtype)
    slab1 = _im2col_3x3(pad1_ref[...], Hp, Wp, Cin)    # already compute_dtype
    h1 = jnp.dot(slab1, w1_ref[...], preferred_element_type=jnp.float32)
    h1 = jnp.maximum(h1 + b1_ref[...], 0.0)            # (Hp*Wp, Cmid), f32

    # ---- Conv2 (3x3, pad=1) + bias + ReLU ----
    _zero_halo(pad2_ref, Hp, Wp, Cmid, compute_dtype)
    pad2_ref[1:Hp + 1, 1:Wp + 1, :] = (
        h1.reshape(Hp, Wp, Cmid).astype(compute_dtype))  # leading split: layout no-op
    slab2 = _im2col_3x3(pad2_ref[...], Hp, Wp, Cmid)
    # Contract (Cout, 9*Cmid) with (Hp*Wp, 9*Cmid) over their last dims so the
    # result is (Cout, Hp*Wp): lane-dense store and already NCHW-ordered.
    h2 = lax.dot_general(w2t_ref[...], slab2,
                         dimension_numbers=(((1,), (1,)), ((), ())),
                         preferred_element_type=jnp.float32)
    h2 = jnp.maximum(h2 + b2_ref[...], 0.0)            # (Cout, Hp*Wp)

    # TODO(synk): dropout_rate=None in this config, so no dropout layer is emitted.
    o_ref[...] = h2.astype(o_ref.dtype)


def down_forward_nhwc(x_nhwc, w1, b1, w2, b2, *, compute_dtype=jnp.float32):
    """x_nhwc: (B, H, W, Cin); w1/w2: HWIO (3,3,Ci,Co); b1/b2: (Co,).
    Returns NCHW output (B, Cout, H//2, W//2)."""
    B, H, W, Cin = x_nhwc.shape
    # TODO(synk): PyTorch MaxPool2d floors on odd H/W; that edge case is not handled.
    assert H % 2 == 0 and W % 2 == 0, "MaxPool2d(2): even H and W required"
    Hp, Wp = H // 2, W // 2
    Cmid = w1.shape[-1]
    Cout = w2.shape[-1]

    # Free relabelings / tiny param reshapes (no image data movement in HBM):
    x_pairs = x_nhwc.reshape(B, H, Wp, 2 * Cin)                 # fold W pairs into lanes
    w1_flat = w1.reshape(9 * Cin, Cmid).astype(compute_dtype)   # im2col weight, conv1
    w2_t = w2.reshape(9 * Cmid, Cout).T.astype(compute_dtype)   # (Cout, 9*Cmid), conv2
    b1_row = b1.reshape(1, Cmid).astype(jnp.float32)
    b2_col = b2.reshape(Cout, 1).astype(jnp.float32)

    kernel = functools.partial(down_kernel, compute_dtype=compute_dtype)

    # TODO(synk): for large images, tile H into row strips with a 2-row halo
    # (grid over strips, strip axis parallel) so the pipeline has enough steps
    # and blocks fit v7x's 64 MiB VMEM; at these toy shapes one block per batch
    # element is the right granularity.
    out = pl.pallas_call(
        kernel,
        out_shape=jax.ShapeDtypeStruct((B, Cout, Hp * Wp), x_nhwc.dtype),
        grid_spec=pltpu.PrefetchScalarGridSpec(
            num_scalar_prefetch=0,
            grid=(B,),
            in_specs=[
                pl.BlockSpec((None, H, Wp, 2 * Cin), lambda b: (b, 0, 0, 0)),
                pl.BlockSpec((9 * Cin, Cmid), lambda b: (0, 0)),
                pl.BlockSpec((1, Cmid), lambda b: (0, 0)),
                pl.BlockSpec((Cout, 9 * Cmid), lambda b: (0, 0)),
                pl.BlockSpec((Cout, 1), lambda b: (0, 0)),
            ],
            out_specs=pl.BlockSpec((None, Cout, Hp * Wp), lambda b: (b, 0, 0)),
            scratch_shapes=[
                pltpu.VMEM((Hp + 2, Wp + 2, Cin), compute_dtype),   # padded pooled input
                pltpu.VMEM((Hp + 2, Wp + 2, Cmid), compute_dtype),  # padded conv1 output
            ],
        ),
        compiler_params=pltpu.CompilerParams(
            dimension_semantics=("parallel",),
            vmem_limit_bytes=32 * 1024 * 1024,
        ),
    )(x_pairs, w1_flat, b1_row, w2_t, b2_col)

    return out.reshape(B, Cout, Hp, Wp)   # free reshape; already NCHW


@jax.jit
def down_forward(x_nchw, w1, b1, w2, b2):
    """NCHW entry point matching the PyTorch module.  Only the input needs a
    layout transpose; the kernel already emits NCHW.  NHWC pipelines should
    call down_forward_nhwc directly and skip this transpose too."""
    x_nhwc = jnp.transpose(x_nchw, (0, 2, 3, 1))
    return down_forward_nhwc(x_nhwc, w1, b1, w2, b2)


def down_reference(x_nchw, w1, b1, w2, b2):
    """Pure-JAX reference (matches PyTorch semantics) for verification."""
    x = jnp.transpose(x_nchw, (0, 2, 3, 1))
    x = jax.lax.reduce_window(x, -jnp.inf, jax.lax.max,
                              (1, 2, 2, 1), (1, 2, 2, 1), "VALID")

    def conv(h, w, bb):
        y = jax.lax.conv_general_dilated(
            h, w, window_strides=(1, 1), padding="SAME",
            dimension_numbers=("NHWC", "HWIO", "NHWC"))
        return jax.nn.relu(y + bb)

    x = conv(x, w1, b1)
    x = conv(x, w2, b2)
    return jnp.transpose(x, (0, 3, 1, 2))


if __name__ == "__main__":
    # Small shapes consistent with Down(in_channels=4, out_channels=8)
    B, Cin, H, W = 2, 4, 16, 16
    Cout = 8
    Cmid = Cout  # DoubleConv default: mid_channels = out_channels

    key = jax.random.PRNGKey(0)
    kx, kw1, kb1, kw2, kb2 = jax.random.split(key, 5)

    x = jax.random.normal(kx, (B, Cin, H, W), jnp.float32)

    # PyTorch Conv2d weight is OIHW; the kernel consumes HWIO
    # (hwio = oihw.transpose(2, 3, 1, 0)).  We build HWIO directly here.
    w1 = jax.random.normal(kw1, (3, 3, Cin, Cmid), jnp.float32) * 0.1
    b1 = jax.random.normal(kb1, (Cmid,), jnp.float32) * 0.05
    w2 = jax.random.normal(kw2, (3, 3, Cmid, Cout), jnp.float32) * 0.1
    b2 = jax.random.normal(kb2, (Cout,), jnp.float32) * 0.05

    out = jax.block_until_ready(down_forward(x, w1, b1, w2, b2))
    ref = jax.block_until_ready(down_reference(x, w1, b1, w2, b2))

    assert out.shape == (B, Cout, H // 2, W // 2), out.shape
    assert jnp.allclose(out, ref, atol=1e-4, rtol=1e-4), \
        f"max abs err = {jnp.max(jnp.abs(out - ref))}"

    print("KERNEL_OK")
</pallas_src>

<mosaic_0001>
module attributes {stable_mosaic.version = 11 : i64} {
  func.func @down_kernel(%arg0: i32, %arg1: memref<1x16x8x8xf32, #tpu.memory_space<vmem>>, %arg2: memref<36x8xf32, #tpu.memory_space<vmem>>, %arg3: memref<1x8xf32, #tpu.memory_space<vmem>>, %arg4: memref<8x72xf32, #tpu.memory_space<vmem>>, %arg5: memref<8x1xf32, #tpu.memory_space<vmem>>, %arg6: memref<1x8x64xf32, #tpu.memory_space<vmem>>, %arg7: memref<10x10x4xf32, #tpu.memory_space<vmem>>, %arg8: memref<10x10x8xf32, #tpu.memory_space<vmem>>) attributes {dimension_semantics = [#tpu.dimension_semantics<parallel>], iteration_bounds = array<i64: 2>, scalar_prefetch = 0 : i64, scratch_operands = 2 : i64, tpu.core_type = #tpu.core_type<tc>, window_params = [{transform_indices = @transform_0, window_bounds = array<i64: 1, 16, 8, 8>}, {pipeline_mode = #tpu.pipeline_mode<synchronous>, transform_indices = @transform_1, window_bounds = array<i64: 36, 8>}, {pipeline_mode = #tpu.pipeline_mode<synchronous>, transform_indices = @transform_2, window_bounds = array<i64: 1, 8>}, {pipeline_mode = #tpu.pipeline_mode<synchronous>, transform_indices = @transform_3, window_bounds = array<i64: 8, 72>}, {pipeline_mode = #tpu.pipeline_mode<synchronous>, transform_indices = @transform_4, window_bounds = array<i64: 8, 1>}, {transform_indices = @transform_5, window_bounds = array<i64: 1, 8, 64>}]} {
    %c0 = arith.constant 0 : index
    %c0_0 = arith.constant 0 : index
    %c0_1 = arith.constant 0 : index
    %c0_2 = arith.constant 0 : index
    %0 = tpu.strided_load %arg1[%c0, %c0_0, %c0_1, %c0_2] {strides = array<i32: 1, 2, 1, 1>} : memref<1x16x8x8xf32, #tpu.memory_space<vmem>>, vector<1x8x8x8xf32>
    %1 = vector.shape_cast %0 : vector<1x8x8x8xf32> to vector<8x8x8xf32>
    %c0_3 = arith.constant 0 : index
    %c1 = arith.constant 1 : index
    %c0_4 = arith.constant 0 : index
    %c0_5 = arith.constant 0 : index
    %2 = tpu.strided_load %arg1[%c0_3, %c1, %c0_4, %c0_5] {strides = array<i32: 1, 2, 1, 1>} : memref<1x16x8x8xf32, #tpu.memory_space<vmem>>, vector<1x8x8x8xf32>
    %3 = vector.shape_cast %2 : vector<1x8x8x8xf32> to vector<8x8x8xf32>
    %4 = arith.maximumf %1, %3 : vector<8x8x8xf32>
    %5 = vector.extract_strided_slice %4 {offsets = [0, 0, 0], sizes = [8, 8, 4], strides = [1, 1, 1]} : vector<8x8x8xf32> to vector<8x8x4xf32>
    %6 = vector.extract_strided_slice %4 {offsets = [0, 0, 4], sizes = [8, 8, 4], strides = [1, 1, 1]} : vector<8x8x8xf32> to vector<8x8x4xf32>
    %7 = arith.maximumf %5, %6 : vector<8x8x4xf32>
    %cst = arith.constant 0.000000e+00 : f32
    %8 = vector.broadcast %cst : f32 to vector<1x10x4xf32>
    %c0_6 = arith.constant 0 : index
    %c0_7 = arith.constant 0 : index
    %c0_8 = arith.constant 0 : index
    %9 = vector.load %arg7[%c0_6, %c0_7, %c0_8] : memref<10x10x4xf32, #tpu.memory_space<vmem>>, vector<1x10x4xf32>
    tpu.vector_store %arg7[%c0_6, %c0_7, %c0_8], %8 {strides = array<i32>} : memref<10x10x4xf32, #tpu.memory_space<vmem>>, vector<1x10x4xf32>,
    %cst_9 = arith.constant 0.000000e+00 : f32
    %10 = vector.broadcast %cst_9 : f32 to vector<1x10x4xf32>
    %c9 = arith.constant 9 : index
    %c0_10 = arith.constant 0 : index
    %c0_11 = arith.constant 0 : index
    %11 = vector.load %arg7[%c9, %c0_10, %c0_11] : memref<10x10x4xf32, #tpu.memory_space<vmem>>, vector<1x10x4xf32>
    tpu.vector_store %arg7[%c9, %c0_10, %c0_11], %10 {strides = array<i32>} : memref<10x10x4xf32, #tpu.memory_space<vmem>>, vector<1x10x4xf32>,
    %cst_12 = arith.constant 0.000000e+00 : f32
    %12 = vector.broadcast %cst_12 : f32 to vector<8x1x4xf32>
    %c1_13 = arith.constant 1 : index
    %c0_14 = arith.constant 0 : index
    %c0_15 = arith.constant 0 : index
    %13 = vector.load %arg7[%c1_13, %c0_14, %c0_15] : memref<10x10x4xf32, #tpu.memory_space<vmem>>, vector<8x1x4xf32>
    tpu.vector_store %arg7[%c1_13, %c0_14, %c0_15], %12 {strides = array<i32>} : memref<10x10x4xf32, #tpu.memory_space<vmem>>, vector<8x1x4xf32>,
    %cst_16 = arith.constant 0.000000e+00 : f32
    %14 = vector.broadcast %cst_16 : f32 to vector<8x1x4xf32>
    %c1_17 = arith.constant 1 : index
    %c9_18 = arith.constant 9 : index
    %c0_19 = arith.constant 0 : index
    %15 = vector.load %arg7[%c1_17, %c9_18, %c0_19] : memref<10x10x4xf32, #tpu.memory_space<vmem>>, vector<8x1x4xf32>
    tpu.vector_store %arg7[%c1_17, %c9_18, %c0_19], %14 {strides = array<i32>} : memref<10x10x4xf32, #tpu.memory_space<vmem>>, vector<8x1x4xf32>,
    %c1_20 = arith.constant 1 : index
    %c1_21 = arith.constant 1 : index
    %c0_22 = arith.constant 0 : index
    %16 = vector.load %arg7[%c1_20, %c1_21, %c0_22] : memref<10x10x4xf32, #tpu.memory_space<vmem>>, vector<8x8x4xf32>
    tpu.vector_store %arg7[%c1_20, %c1_21, %c0_22], %7 {strides = array<i32>} : memref<10x10x4xf32, #tpu.memory_space<vmem>>, vector<8x8x4xf32>,
    %c0_23 = arith.constant 0 : index
    %c0_24 = arith.constant 0 : index
    %c0_25 = arith.constant 0 : index
    %17 = vector.load %arg7[%c0_23, %c0_24, %c0_25] : memref<10x10x4xf32, #tpu.memory_space<vmem>>, vector<10x10x4xf32>
    %18 = vector.extract_strided_slice %17 {offsets = [0, 0, 0], sizes = [8, 8, 4], strides = [1, 1, 1]} : vector<10x10x4xf32> to vector<8x8x4xf32>
    %19 = vector.extract_strided_slice %17 {offsets = [0, 1, 0], sizes = [8, 8, 4], strides = [1, 1, 1]} : vector<10x10x4xf32> to vector<8x8x4xf32>
    %20 = vector.extract_strided_slice %17 {offsets = [0, 2, 0], sizes = [8, 8, 4], strides = [1, 1, 1]} : vector<10x10x4xf32> to vector<8x8x4xf32>
    %21 = vector.extract_strided_slice %17 {offsets = [1, 0, 0], sizes = [8, 8, 4], strides = [1, 1, 1]} : vector<10x10x4xf32> to vector<8x8x4xf32>
    %22 = vector.extract_strided_slice %17 {offsets = [1, 1, 0], sizes = [8, 8, 4], strides = [1, 1, 1]} : vector<10x10x4xf32> to vector<8x8x4xf32>
    %23 = vector.extract_strided_slice %17 {offsets = [1, 2, 0], sizes = [8, 8, 4], strides = [1, 1, 1]} : vector<10x10x4xf32> to vector<8x8x4xf32>
    %24 = vector.extract_strided_slice %17 {offsets = [2, 0, 0], sizes = [8, 8, 4], strides = [1, 1, 1]} : vector<10x10x4xf32> to vector<8x8x4xf32>
    %25 = vector.extract_strided_slice %17 {offsets = [2, 1, 0], sizes = [8, 8, 4], strides = [1, 1, 1]} : vector<10x10x4xf32> to vector<8x8x4xf32>
    %26 = vector.extract_strided_slice %17 {offsets = [2, 2, 0], sizes = [8, 8, 4], strides = [1, 1, 1]} : vector<10x10x4xf32> to vector<8x8x4xf32>
    %27 = tpu.concatenate %18, %19, %20, %21, %22, %23, %24, %25, %26 in 2 : vector<8x8x4xf32>, vector<8x8x4xf32>, vector<8x8x4xf32>, vector<8x8x4xf32>, vector<8x8x4xf32>, vector<8x8x4xf32>, vector<8x8x4xf32>, vector<8x8x4xf32>, vector<8x8x4xf32> -> vector<8x8x36xf32>
    %28 = vector.shape_cast %27 : vector<8x8x36xf32> to vector<64x36xf32>
    %c0_26 = arith.constant 0 : index
    %c0_27 = arith.constant 0 : index
    %29 = vector.load %arg2[%c0_26, %c0_27] : memref<36x8xf32, #tpu.memory_space<vmem>>, vector<36x8xf32>
    %cst_28 = arith.constant dense<0.000000e+00> : vector<64x8xf32>
    %30 = tpu.matmul %28, %29, %cst_28 {dimension_numbers = #tpu.dot_dimension_numbers<[1], [0], [0], [1], [0, 0, 1, 1], [], []>} : vector<64x36xf32>, vector<36x8xf32>, vector<64x8xf32> -> vector<64x8xf32>
    %c0_29 = arith.constant 0 : index
    %c0_30 = arith.constant 0 : index
    %31 = vector.load %arg3[%c0_29, %c0_30] : memref<1x8xf32, #tpu.memory_space<vmem>>, vector<1x8xf32>
    %32 = vector.broadcast %31 : vector<1x8xf32> to vector<64x8xf32>
    %33 = arith.addf %30, %32 : vector<64x8xf32>
    %cst_31 = arith.constant 0.000000e+00 : f32
    %34 = vector.broadcast %cst_31 : f32 to vector<64x8xf32>
    %35 = arith.maximumf %33, %34 : vector<64x8xf32>
    %cst_32 = arith.constant 0.000000e+00 : f32
    %36 = vector.broadcast %cst_32 : f32 to vector<1x10x8xf32>
    %c0_33 = arith.constant 0 : index
    %c0_34 = arith.constant 0 : index
    %c0_35 = arith.constant 0 : index
    %37 = vector.load %arg8[%c0_33, %c0_34, %c0_35] : memref<10x10x8xf32, #tpu.memory_space<vmem>>, vector<1x10x8xf32>
    tpu.vector_store %arg8[%c0_33, %c0_34, %c0_35], %36 {strides = array<i32>} : memref<10x10x8xf32, #tpu.memory_space<vmem>>, vector<1x10x8xf32>,
    %cst_36 = arith.constant 0.000000e+00 : f32
    %38 = vector.broadcast %cst_36 : f32 to vector<1x10x8xf32>
    %c9_37 = arith.constant 9 : index
    %c0_38 = arith.constant 0 : index
    %c0_39 = arith.constant 0 : index
    %39 = vector.load %arg8[%c9_37, %c0_38, %c0_39] : memref<10x10x8xf32, #tpu.memory_space<vmem>>, vector<1x10x8xf32>
    tpu.vector_store %arg8[%c9_37, %c0_38, %c0_39], %38 {strides = array<i32>} : memref<10x10x8xf32, #tpu.memory_space<vmem>>, vector<1x10x8xf32>,
    %cst_40 = arith.constant 0.000000e+00 : f32
    %40 = vector.broadcast %cst_40 : f32 to vector<8x1x8xf32>
    %c1_41 = arith.constant 1 : index
    %c0_42 = arith.constant 0 : index
    %c0_43 = arith.constant 0 : index
    %41 = vector.load %arg8[%c1_41, %c0_42, %c0_43] : memref<10x10x8xf32, #tpu.memory_space<vmem>>, vector<8x1x8xf32>
    tpu.vector_store %arg8[%c1_41, %c0_42, %c0_43], %40 {strides = array<i32>} : memref<10x10x8xf32, #tpu.memory_space<vmem>>, vector<8x1x8xf32>,
    %cst_44 = arith.constant 0.000000e+00 : f32
    %42 = vector.broadcast %cst_44 : f32 to vector<8x1x8xf32>
    %c1_45 = arith.constant 1 : index
    %c9_46 = arith.constant 9 : index
    %c0_47 = arith.constant 0 : index
    %43 = vector.load %arg8[%c1_45, %c9_46, %c0_47] : memref<10x10x8xf32, #tpu.memory_space<vmem>>, vector<8x1x8xf32>
    tpu.vector_store %arg8[%c1_45, %c9_46, %c0_47], %42 {strides = array<i32>} : memref<10x10x8xf32, #tpu.memory_space<vmem>>, vector<8x1x8xf32>,
    %44 = vector.shape_cast %35 : vector<64x8xf32> to vector<8x8x8xf32>
    %c1_48 = arith.constant 1 : index
    %c1_49 = arith.constant 1 : index
    %c0_50 = arith.constant 0 : index
    %45 = vector.load %arg8[%c1_48, %c1_49, %c0_50] : memref<10x10x8xf32, #tpu.memory_space<vmem>>, vector<8x8x8xf32>
    tpu.vector_store %arg8[%c1_48, %c1_49, %c0_50], %44 {strides = array<i32>} : memref<10x10x8xf32, #tpu.memory_space<vmem>>, vector<8x8x8xf32>,
    %c0_51 = arith.constant 0 : index
    %c0_52 = arith.constant 0 : index
    %c0_53 = arith.constant 0 : index
    %46 = vector.load %arg8[%c0_51, %c0_52, %c0_53] : memref<10x10x8xf32, #tpu.memory_space<vmem>>, vector<10x10x8xf32>
    %47 = vector.extract_strided_slice %46 {offsets = [0, 0, 0], sizes = [8, 8, 8], strides = [1, 1, 1]} : vector<10x10x8xf32> to vector<8x8x8xf32>
    %48 = vector.extract_strided_slice %46 {offsets = [0, 1, 0], sizes = [8, 8, 8], strides = [1, 1, 1]} : vector<10x10x8xf32> to vector<8x8x8xf32>
    %49 = vector.extract_strided_slice %46 {offsets = [0, 2, 0], sizes = [8, 8, 8], strides = [1, 1, 1]} : vector<10x10x8xf32> to vector<8x8x8xf32>
    %50 = vector.extract_strided_slice %46 {offsets = [1, 0, 0], sizes = [8, 8, 8], strides = [1, 1, 1]} : vector<10x10x8xf32> to vector<8x8x8xf32>
    %51 = vector.extract_strided_slice %46 {offsets = [1, 1, 0], sizes = [8, 8, 8], strides = [1, 1, 1]} : vector<10x10x8xf32> to vector<8x8x8xf32>
    %52 = vector.extract_strided_slice %46 {offsets = [1, 2, 0], sizes = [8, 8, 8], strides = [1, 1, 1]} : vector<10x10x8xf32> to vector<8x8x8xf32>
    %53 = vector.extract_strided_slice %46 {offsets = [2, 0, 0], sizes = [8, 8, 8], strides = [1, 1, 1]} : vector<10x10x8xf32> to vector<8x8x8xf32>
    %54 = vector.extract_strided_slice %46 {offsets = [2, 1, 0], sizes = [8, 8, 8], strides = [1, 1, 1]} : vector<10x10x8xf32> to vector<8x8x8xf32>
    %55 = vector.extract_strided_slice %46 {offsets = [2, 2, 0], sizes = [8, 8, 8], strides = [1, 1, 1]} : vector<10x10x8xf32> to vector<8x8x8xf32>
    %56 = tpu.concatenate %47, %48, %49, %50, %51, %52, %53, %54, %55 in 2 : vector<8x8x8xf32>, vector<8x8x8xf32>, vector<8x8x8xf32>, vector<8x8x8xf32>, vector<8x8x8xf32>, vector<8x8x8xf32>, vector<8x8x8xf32>, vector<8x8x8xf32>, vector<8x8x8xf32> -> vector<8x8x72xf32>
    %57 = vector.shape_cast %56 : vector<8x8x72xf32> to vector<64x72xf32>
    %c0_54 = arith.constant 0 : index
    %c0_55 = arith.constant 0 : index
    %58 = vector.load %arg4[%c0_54, %c0_55] : memref<8x72xf32, #tpu.memory_space<vmem>>, vector<8x72xf32>
    %cst_56 = arith.constant dense<0.000000e+00> : vector<8x64xf32>
    %59 = tpu.matmul %58, %57, %cst_56 {dimension_numbers = #tpu.dot_dimension_numbers<[1], [1], [0], [0], [0, 0, 1, 0], [], []>} : vector<8x72xf32>, vector<64x72xf32>, vector<8x64xf32> -> vector<8x64xf32>
    %c0_57 = arith.constant 0 : index
    %c0_58 = arith.constant 0 : index
    %60 = vector.load %arg5[%c0_57, %c0_58] : memref<8x1xf32, #tpu.memory_space<vmem>>, vector<8x1xf32>
    %61 = vector.broadcast %60 : vector<8x1xf32> to vector<8x64xf32>
    %62 = arith.addf %59, %61 : vector<8x64xf32>
    %cst_59 = arith.constant 0.000000e+00 : f32
    %63 = vector.broadcast %cst_59 : f32 to vector<8x64xf32>
    %64 = arith.maximumf %62, %63 : vector<8x64xf32>
    %c0_60 = arith.constant 0 : index
    %c0_61 = arith.constant 0 : index
    %c0_62 = arith.constant 0 : index
    %65 = vector.load %arg6[%c0_60, %c0_61, %c0_62] : memref<1x8x64xf32, #tpu.memory_space<vmem>>, vector<1x8x64xf32>
    %66 = vector.shape_cast %65 : vector<1x8x64xf32> to vector<8x64xf32>
    %67 = vector.shape_cast %64 : vector<8x64xf32> to vector<1x8x64xf32>
    tpu.vector_store %arg6[%c0_60, %c0_61, %c0_62], %67 {strides = array<i32>} : memref<1x8x64xf32, #tpu.memory_space<vmem>>, vector<1x8x64xf32>,
    return
  }
  func.func @transform_0(%arg0: i32) -> (i32, i32, i32, i32) {
    %c0_i32 = arith.constant 0 : i32
    %c0_i32_0 = arith.constant 0 : i32
    %c0_i32_1 = arith.constant 0 : i32
    %c0_i32_2 = arith.constant 0 : i32
    return %arg0, %c0_i32, %c0_i32_0, %c0_i32_1 : i32, i32, i32, i32
  }
  func.func @transform_1(%arg0: i32) -> (i32, i32) {
    %c0_i32 = arith.constant 0 : i32
    %c0_i32_0 = arith.constant 0 : i32
    %c0_i32_1 = arith.constant 0 : i32
    return %c0_i32, %c0_i32_0 : i32, i32
  }
  func.func @transform_2(%arg0: i32) -> (i32, i32) {
    %c0_i32 = arith.constant 0 : i32
    %c0_i32_0 = arith.constant 0 : i32
    %c0_i32_1 = arith.constant 0 : i32
    return %c0_i32, %c0_i32_0 : i32, i32
  }
  func.func @transform_3(%arg0: i32) -> (i32, i32) {
    %c0_i32 = arith.constant 0 : i32
    %c0_i32_0 = arith.constant 0 : i32
    %c0_i32_1 = arith.constant 0 : i32
    return %c0_i32, %c0_i32_0 : i32, i32
  }
  func.func @transform_4(%arg0: i32) -> (i32, i32) {
    %c0_i32 = arith.constant 0 : i32
    %c0_i32_0 = arith.constant 0 : i32
    %c0_i32_1 = arith.constant 0 : i32
    return %c0_i32, %c0_i32_0 : i32, i32
  }
  func.func @transform_5(%arg0: i32) -> (i32, i32, i32) {
    %c0_i32 = arith.constant 0 : i32
    %c0_i32_0 = arith.constant 0 : i32
    %c0_i32_1 = arith.constant 0 : i32
    return %arg0, %c0_i32, %c0_i32_0 : i32, i32, i32
  }
}

</mosaic_0001>

<llo_original>
// kernel: down_forward.1
$region0: #{down_forward.1}
  #allocation0 [shape = 'u32[]', space=smem, size = 0x4, offset = 0x4, fixed_abs, tag = 'smem constant byte address 0x4 - core index']
  #allocation1 [shape = 'u32[144,128]{1,0:T(1,128)}', space=vmem, size = 0x12000, scoped, tag = 'internal scratch']
  #allocation2 [shape = 'f32[10,10,4]{2,1,0:T(8,128)}', space=vmem, size = 0x14000, scoped, tag = 'scratch operand']
  #allocation3 [shape = 'f32[10,10,8]{2,1,0:T(8,128)}', space=vmem, size = 0x14000, scoped, tag = 'scratch operand']
  %s0 = inlined_call_operand.vmem [shape: f32[2,16,8,8], index: 0, kind: input, shape index: {}]
  %s1 = inlined_call_operand.vmem [shape: f32[36,8], index: 1, kind: input, shape index: {}]
  %s2 = inlined_call_operand.vmem [shape: f32[1,8], index: 2, kind: input, shape index: {}]
  %s3 = inlined_call_operand.vmem [shape: f32[8,72], index: 3, kind: input, shape index: {}]
  %s4 = inlined_call_operand.vmem [shape: f32[8,1], index: 4, kind: input, shape index: {}]
  %s5 = inlined_call_operand.vmem [shape: f32[2,8,64], index: 5, kind: output, shape index: {}]
  %s6 = sld [smem:[#allocation0]]
  $region53: #{down_forward.1} parent=0
    _
  %s8 = ssub.s32 1, %s6
  %s9 = scalar_select 0, %s8, %s6
  loop: start=0, step=1, limit=4
  $region2: #{down_forward.1} parent=0 // loop_pre_header
    _
  $region3: #{down_forward.1} parent=0 // loop_header
    %s11 = sphi 0, %s15
    %p12 = scmp.ge.s32.totalorder %s11, 4
    %s21 = sphi 0, %s23
    %s24 = sphi 0, %s21
    %s25 = sphi 0, %s24
    %s41 = sphi 0, %s25
    %s45 = sphi 0, %s45
    %s47 = sphi 0, %s45
    %s48 = sphi 0, %s47
    %s62 = sphi 0, %s48
    %s66 = sphi 0, %s66
    %s68 = sphi 0, %s66
    %s69 = sphi 0, %s68
    %s83 = sphi 0, %s69
    %s87 = sphi 0, %s87
    %s89 = sphi 0, %s87
    %s90 = sphi 0, %s89
    %s104 = sphi 0, %s90
    %s108 = sphi 0, %s108
    %s110 = sphi 0, %s108
    %s111 = sphi 0, %s110
    %s125 = sphi 0, %s111
    %s131 = sphi 0, %s133
    %s134 = sphi 0, %s131
    %s135 = sphi 0, %s134
    %s151 = sphi 0, %s135
  $region4: #{down_forward.1} parent=0 // loop_header_branch
    %14 = sbr.rel (%p12) target = $region8
  $region5: #{down_forward.1} parent=0 // loop_body
    %s16 = ssub.s32 %s11, 1
    %s17 = ssub.s32 %s11, 2
    %s18 = sadd.s32 %s11, 1
    %s19 = ssub.s32 %s11, %s18
    %p20 = scmp.eq.s32.totalorder %s19, 0
    %s22 = sadd.s32 %s21, 1
    %s23 = scalar_select %p20, %s21, %s22
    %p26 = pneg %p20
    %p27 = scmp.eq.s32.totalorder %s11, 1
    %p28 = por %p26, %p27
    %p29 = scmp.ne.s32.totalorder %s21, %s24
    %p30 = scmp.eq.s32.totalorder %s11, 0
    %p31 = por %p29, %p30
    %p32 = scmp.ne.s32.totalorder %s21, %s24
    %p33 = scmp.eq.s32.totalorder %s16, 1
    %p34 = por %p32, %p33
    %p35 = scmp.ne.s32.totalorder %s24, %s25
    %p36 = scmp.eq.s32.totalorder %s16, 0
    %p37 = por %p35, %p36
    %p38 = scmp.ne.s32.totalorder %s24, %s25
    %p39 = scmp.eq.s32.totalorder %s17, 1
    %p40 = por %p38, %p39
    %p42 = scmp.ne.s32.totalorder %s25, %s41
    %p43 = scmp.eq.s32.totalorder %s17, 0
    %p44 = por %p42, %p43
    %s46 = sadd.s32 %s45, 1
    %p49 = scmp.eq.s32.totalorder %s11, 1
    %p50 = scmp.ne.s32.totalorder %s45, %s47
    %p51 = scmp.eq.s32.totalorder %s11, 0
    %p52 = por %p50, %p51
    %p53 = scmp.ne.s32.totalorder %s45, %s47
    %p54 = scmp.eq.s32.totalorder %s16, 1
    %p55 = por %p53, %p54
    %p56 = scmp.ne.s32.totalorder %s47, %s48
    %p57 = scmp.eq.s32.totalorder %s16, 0
    %p58 = por %p56, %p57
    %p59 = scmp.ne.s32.totalorder %s47, %s48
    %p60 = scmp.eq.s32.totalorder %s17, 1
    %p61 = por %p59, %p60
    %p63 = scmp.ne.s32.totalorder %s48, %s62
    %p64 = scmp.eq.s32.totalorder %s17, 0
    %p65 = por %p63, %p64
    %s67 = sadd.s32 %s66, 1
    %p70 = scmp.eq.s32.totalorder %s11, 1
    %p71 = scmp.ne.s32.totalorder %s66, %s68
    %p72 = scmp.eq.s32.totalorder %s11, 0
    %p73 = por %p71, %p72
    %p74 = scmp.ne.s32.totalorder %s66, %s68
    %p75 = scmp.eq.s32.totalorder %s16, 1
    %p76 = por %p74, %p75
    %p77 = scmp.ne.s32.totalorder %s68, %s69
    %p78 = scmp.eq.s32.totalorder %s16, 0
    %p79 = por %p77, %p78
    %p80 = scmp.ne.s32.totalorder %s68, %s69
    %p81 = scmp.eq.s32.totalorder %s17, 1
    %p82 = por %p80, %p81
    %p84 = scmp.ne.s32.totalorder %s69, %s83
    %p85 = scmp.eq.s32.totalorder %s17, 0
    %p86 = por %p84, %p85
    %s88 = sadd.s32 %s87, 1
    %p91 = scmp.eq.s32.totalorder %s11, 1
    %p92 = scmp.ne.s32.totalorder %s87, %s89
    %p93 = scmp.eq.s32.totalorder %s11, 0
    %p94 = por %p92, %p93
    %p95 = scmp.ne.s32.totalorder %s87, %s89
    %p96 = scmp.eq.s32.totalorder %s16, 1
    %p97 = por %p95, %p96
    %p98 = scmp.ne.s32.totalorder %s89, %s90
    %p99 = scmp.eq.s32.totalorder %s16, 0
    %p100 = por %p98, %p99
    %p101 = scmp.ne.s32.totalorder %s89, %s90
    %p102 = scmp.eq.s32.totalorder %s17, 1
    %p103 = por %p101, %p102
    %p105 = scmp.ne.s32.totalorder %s90, %s104
    %p106 = scmp.eq.s32.totalorder %s17, 0
    %p107 = por %p105, %p106
    %s109 = sadd.s32 %s108, 1
    %p112 = scmp.eq.s32.totalorder %s11, 1
    %p113 = scmp.ne.s32.totalorder %s108, %s110
    %p114 = scmp.eq.s32.totalorder %s11, 0
    %p115 = por %p113, %p114
    %p116 = scmp.ne.s32.totalorder %s108, %s110
    %p117 = scmp.eq.s32.totalorder %s16, 1
    %p118 = por %p116, %p117
    %p119 = scmp.ne.s32.totalorder %s110, %s111
    %p120 = scmp.eq.s32.totalorder %s16, 0
    %p121 = por %p119, %p120
    %p122 = scmp.ne.s32.totalorder %s110, %s111
    %p123 = scmp.eq.s32.totalorder %s17, 1
    %p124 = por %p122, %p123
    %p126 = scmp.ne.s32.totalorder %s111, %s125
    %p127 = scmp.eq.s32.totalorder %s17, 0
    %p128 = por %p126, %p127
    %s129 = ssub.s32 %s11, %s18
    %p130 = scmp.eq.s32.totalorder %s129, 0
    %s132 = sadd.s32 %s131, 1
    %s133 = scalar_select %p130, %s131, %s132
    %p136 = pneg %p130
    %p137 = scmp.eq.s32.totalorder %s11, 1
    %p138 = por %p136, %p137
    %p139 = scmp.ne.s32.totalorder %s131, %s134
    %p140 = scmp.eq.s32.totalorder %s11, 0
    %p141 = por %p139, %p140
    %p142 = scmp.ne.s32.totalorder %s131, %s134
    %p143 = scmp.eq.s32.totalorder %s16, 1
    %p144 = por %p142, %p143
    %p145 = scmp.ne.s32.totalorder %s134, %s135
    %p146 = scmp.eq.s32.totalorder %s16, 0
    %p147 = por %p145, %p146
    %p148 = scmp.ne.s32.totalorder %s134, %s135
    %p149 = scmp.eq.s32.totalorder %s17, 1
    %p150 = por %p148, %p149
    %p152 = scmp.ne.s32.totalorder %s135, %s151
    %p153 = scmp.eq.s32.totalorder %s17, 0
    %p154 = por %p152, %p153
    %p155 = scmp.le.s32.totalorder 1, %s11
    %p156 = scmp.lt.s32.totalorder %s11, 3
    %p157 = pnand %p155, %p156
    %p158 = pneg %p157
    // Predicated region
    $region9: #{down_forward.1} parent=5 // pred_check
      _
    $region10: #{down_forward.1} parent=5 // pred_check_branch
      %160 = sbr.rel (%p157) target = $region12
    $region11: #{down_forward.1} parent=5 // pred_region
      %s161 = ssub.s32 %s11, 1
      // Predicated region
      $region13: #{down_forward.1} parent=11 // pred_check
        %p162 = pneg %p58
      $region14: #{down_forward.1} parent=11 // pred_check_branch
        %164 = sbr.rel (%p162) target = $region16
      $region15: #{down_forward.1} parent=11 // pred_region
        _
      $region16: #{down_forward.1} parent=11 // pred_fallthru
        _
      // Predicated region
      $region17: #{down_forward.1} parent=11 // pred_check
        %p165 = pneg %p79
      $region18: #{down_forward.1} parent=11 // pred_check_branch
        %167 = sbr.rel (%p165) target = $region20
      $region19: #{down_forward.1} parent=11 // pred_region
        _
      $region20: #{down_forward.1} parent=11 // pred_fallthru
        _
      // Predicated region
      $region21: #{down_forward.1} parent=11 // pred_check
        %p168 = pneg %p100
      $region22: #{down_forward.1} parent=11 // pred_check_branch
        %170 = sbr.rel (%p168) target = $region24
      $region23: #{down_forward.1} parent=11 // pred_region
        _
      $region24: #{down_forward.1} parent=11 // pred_fallthru
        _
      // Predicated region
      $region25: #{down_forward.1} parent=11 // pred_check
        %p171 = pneg %p121
      $region26: #{down_forward.1} parent=11 // pred_check_branch
        %173 = sbr.rel (%p171) target = $region28
      $region27: #{down_forward.1} parent=11 // pred_region
        _
      $region28: #{down_forward.1} parent=11 // pred_fallthru
        _
    $region12: #{down_forward.1} parent=5 // pred_fallthru
      _
    %p174 = scmp.lt.s32.totalorder %s11, 2
    // Predicated region
    $region29: #{down_forward.1} parent=5 // pred_check
      %p175 = pneg %p174
    $region30: #{down_forward.1} parent=5 // pred_check_branch
      %177 = sbr.rel (%p175) target = $region32
    $region31: #{down_forward.1} parent=5 // pred_region
      // Predicated region
      $region33: #{down_forward.1} parent=31 // pred_check
        %p178 = pneg %p31
      $region34: #{down_forward.1} parent=31 // pred_check_branch
        %180 = sbr.rel (%p178) target = $region36
      $region35: #{down_forward.1} parent=31 // pred_region
        %p181 = scmp.lt.s32.totalorder %s11, 1
        %s182 = scalar_select %p181, %s11, 1
        %s183 = smul.addr %s182, 16
        %s184 = smul.addr %s183, 8
        %s185 = scalar_lea.vmem %s0, %s184
      $region36: #{down_forward.1} parent=31 // pred_fallthru
        _
    $region32: #{down_forward.1} parent=5 // pred_fallthru
      _
    %p186 = scmp.le.s32.totalorder 1, %s11
    %p187 = scmp.lt.s32.totalorder %s11, 3
    %p188 = pnand %p186, %p187
    %p189 = pneg %p188
    // Predicated region
    $region37: #{down_forward.1} parent=5 // pred_check
      _
    $region38: #{down_forward.1} parent=5 // pred_check_branch
      %191 = sbr.rel (%p188) target = $region40
    $region39: #{down_forward.1} parent=5 // pred_region
      %s192 = ssub.s32 %s11, 1
      %p193 = scmp.lt.s32.totalorder %s16, 1
      %s194 = scalar_select %p193, %s16, 1
      %s195 = smul.addr %s194, 16
      %s196 = smul.addr %s195, 8
      %s197 = scalar_lea.vmem %s0, %s196
      %p198 = pneg %p37
      %p199 = pneg %p34
      %p200 = pneg %p58
      %p201 = pneg %p55
      %p202 = pneg %p79
      %p203 = pneg %p76
      %p204 = pneg %p100
      %p205 = pneg %p97
      %p206 = pneg %p121
      %p207 = pneg %p118
      %p208 = pneg %p147
      %p209 = pneg %p144
      %p210 = scmp.lt.s32.totalorder %s16, 1
      %s211 = scalar_select %p210, %s16, 1
      %s212 = smul.addr %s211, 8
      %s213 = scalar_lea.vmem %s5, %s212
      %p214 = scmp.lt.s32.totalorder %s16, 1
      %s215 = scalar_select %p214, %s16, 1
      %s216 = smul.addr %s215, 16
      %s217 = smul.addr %s216, 8
      %s218 = scalar_lea.vmem %s0, %s217
      %p219 = scmp.lt.s32.totalorder %s16, 1
      %s220 = scalar_select %p219, %s16, 1
      %s221 = smul.addr %s220, 8
      %s222 = scalar_lea.vmem %s5, %s221
      %v223 = vld [vmem:[%s218] sm:$0xff]
      %v224 = vld [vmem:[%s218 + $0x10] sm:$0xff]
      %v225 = vld [vmem:[%s218 + $0x20] sm:$0xff]
      %v226 = vld [vmem:[%s218 + $0x30] sm:$0xff]
      %v227 = vld [vmem:[%s218 + $0x40] sm:$0xff]
      %v228 = vld [vmem:[%s218 + $0x50] sm:$0xff]
      %v229 = vld [vmem:[%s218 + $0x60] sm:$0xff]
      %v230 = vld [vmem:[%s218 + $0x70] sm:$0xff]
      %s231 = scalar_lea.vmem %s218, 8
      %v232 = vld [vmem:[%s231] sm:$0xff]
      %v233 = vld [vmem:[%s231 + $0x10] sm:$0xff]
      %v234 = vld [vmem:[%s231 + $0x20] sm:$0xff]
      %v235 = vld [vmem:[%s231 + $0x30] sm:$0xff]
      %v236 = vld [vmem:[%s231 + $0x40] sm:$0xff]
      %v237 = vld [vmem:[%s231 + $0x50] sm:$0xff]
      %v238 = vld [vmem:[%s231 + $0x60] sm:$0xff]
      %v239 = vld [vmem:[%s231 + $0x70] sm:$0xff]
      %v240 = vmax.f32 %v223, %v232
      %v241 = vmax.f32 %v224, %v233
      %v242 = vmax.f32 %v225, %v234
      %v243 = vmax.f32 %v226, %v235
      %v244 = vmax.f32 %v227, %v236
      %v245 = vmax.f32 %v228, %v237
      %v246 = vmax.f32 %v229, %v238
      %v247 = vmax.f32 %v230, %v239
      %256 = vrot.lane.b32.xlu0 %v240, 124
      %v257 = vpop.permute.xlu0 %256
      %258 = vrot.lane.b32.xlu0 %v241, 124
      %v259 = vpop.permute.xlu0 %258
      %260 = vrot.lane.b32.xlu0 %v242, 124
      %v261 = vpop.permute.xlu0 %260
      %262 = vrot.lane.b32.xlu0 %v243, 124
      %v263 = vpop.permute.xlu0 %262
      %264 = vrot.lane.b32.xlu0 %v244, 124
      %v265 = vpop.permute.xlu0 %264
      %266 = vrot.lane.b32.xlu0 %v245, 124
      %v267 = vpop.permute.xlu0 %266
      %268 = vrot.lane.b32.xlu0 %v246, 124
      %v269 = vpop.permute.xlu0 %268
      %270 = vrot.lane.b32.xlu0 %v247, 124
      %v271 = vpop.permute.xlu0 %270
      %v280 = vmax.f32 %v240, %v257
      %v281 = vmax.f32 %v241, %v259
      %v282 = vmax.f32 %v242, %v261
      %v283 = vmax.f32 %v243, %v263
      %v284 = vmax.f32 %v244, %v265
      %v285 = vmax.f32 %v245, %v267
      %v286 = vmax.f32 %v246, %v269
      %v287 = vmax.f32 %v247, %v271
      %vm288 = vcmask 31744
      %289 = vst.msk [vmem:[#allocation2] sm:$0xff] %vm288, 0.0
      %vm290 = vcmask 25600
      %291 = vst.msk [vmem:[#allocation2 + $0x8] sm:$0x3] %vm290, 0.0
      %s292 = scalar_lea.vmem [#allocation2], 144
      %293 = vst.msk [vmem:[%s292] sm:$0xff] %vm288, 0.0
      %294 = vst.msk [vmem:[%s292 + $0x8] sm:$0x3] %vm290, 0.0
      %s295 = scalar_lea.vmem [#allocation2], 16
      %vm296 = vcmask 24576
      %297 = vst.msk [vmem:[%s295] sm:$0x1] %vm296, 0.0
      %298 = vst.msk [vmem:[%s295 + $0x10] sm:$0x1] %vm296, 0.0
      %299 = vst.msk [vmem:[%s295 + $0x20] sm:$0x1] %vm296, 0.0
      %300 = vst.msk [vmem:[%s295 + $0x30] sm:$0x1] %vm296, 0.0
      %301 = vst.msk [vmem:[%s295 + $0x40] sm:$0x1] %vm296, 0.0
      %302 = vst.msk [vmem:[%s295 + $0x50] sm:$0x1] %vm296, 0.0
      %303 = vst.msk [vmem:[%s295 + $0x60] sm:$0x1] %vm296, 0.0
      %304 = vst.msk [vmem:[%s295 + $0x70] sm:$0x1] %vm296, 0.0
      %305 = vst.msk [vmem:[%s295 + $0x9] sm:$0x1] %vm296, 0.0
      %306 = vst.msk [vmem:[%s295 + $0x19] sm:$0x1] %vm296, 0.0
      %307 = vst.msk [vmem:[%s295 + $0x29] sm:$0x1] %vm296, 0.0
      %308 = vst.msk [vmem:[%s295 + $0x39] sm:$0x1] %vm296, 0.0
      %309 = vst.msk [vmem:[%s295 + $0x49] sm:$0x1] %vm296, 0.0
      %310 = vst.msk [vmem:[%s295 + $0x59] sm:$0x1] %vm296, 0.0
      %311 = vst.msk [vmem:[%s295 + $0x69] sm:$0x1] %vm296, 0.0
      %312 = vst.msk [vmem:[%s295 + $0x79] sm:$0x1] %vm296, 0.0
      %313 = vst.msk [vmem:[%s295 + $0x1] sm:$0xff] %vm288, %v280
      %314 = vst.msk [vmem:[%s295 + $0x11] sm:$0xff] %vm288, %v281
      %315 = vst.msk [vmem:[%s295 + $0x21] sm:$0xff] %vm288, %v282
      %316 = vst.msk [vmem:[%s295 + $0x31] sm:$0xff] %vm288, %v283
      %317 = vst.msk [vmem:[%s295 + $0x41] sm:$0xff] %vm288, %v284
      %318 = vst.msk [vmem:[%s295 + $0x51] sm:$0xff] %vm288, %v285
      %319 = vst.msk [vmem:[%s295 + $0x61] sm:$0xff] %vm288, %v286
      %320 = vst.msk [vmem:[%s295 + $0x71] sm:$0xff] %vm288, %v287
      %v321 = vld [vmem:[#allocation2] sm:$0xff]
      %v322 = vld [vmem:[#allocation2 + $0x8] sm:$0x3]
      %v323 = vld [vmem:[#allocation2 + $0x10] sm:$0xff]
      %v324 = vld [vmem:[#allocation2 + $0x18] sm:$0x3]
      %v325 = vld [vmem:[#allocation2 + $0x20] sm:$0xff]
      %v326 = vld [vmem:[#allocation2 + $0x28] sm:$0x3]
      %v327 = vld [vmem:[#allocation2 + $0x30] sm:$0xff]
      %v328 = vld [vmem:[#allocation2 + $0x38] sm:$0x3]
      %v329 = vld [vmem:[#allocation2 + $0x40] sm:$0xff]
      %v330 = vld [vmem:[#allocation2 + $0x48] sm:$0x3]
      %v331 = vld [vmem:[#allocation2 + $0x50] sm:$0xff]
      %v332 = vld [vmem:[#allocation2 + $0x58] sm:$0x3]
      %v333 = vld [vmem:[#allocation2 + $0x60] sm:$0xff]
      %v334 = vld [vmem:[#allocation2 + $0x68] sm:$0x3]
      %v335 = vld [vmem:[#allocation2 + $0x70] sm:$0xff]
      %v336 = vld [vmem:[#allocation2 + $0x78] sm:$0x3]
      %v337 = vld [vmem:[#allocation2 + $0x80] sm:$0xff]
      %v338 = vld [vmem:[#allocation2 + $0x88] sm:$0x3]
      %v339 = vld [vmem:[#allocation2 + $0x90] sm:$0xff]
      %v340 = vld [vmem:[#allocation2 + $0x98] sm:$0x3]
      %vm357 = vcmask 1046528
      %v358 = vrot.slane %v321, 1
      %v359 = vrot.slane %v322, 1
      %v360 = vsel %vm357, %v358, %v359
      %v361 = vrot.slane %v323, 1
      %v362 = vrot.slane %v324, 1
      %v363 = vsel %vm357, %v361, %v362
      %v364 = vrot.slane %v325, 1
      %v365 = vrot.slane %v326, 1
      %v366 = vsel %vm357, %v364, %v365
      %v367 = vrot.slane %v327, 1
      %v368 = vrot.slane %v328, 1
      %v369 = vsel %vm357, %v367, %v368
      %v370 = vrot.slane %v329, 1
      %v371 = vrot.slane %v330, 1
      %v372 = vsel %vm357, %v370, %v371
      %v373 = vrot.slane %v331, 1
      %v374 = vrot.slane %v332, 1
      %v375 = vsel %vm357, %v373, %v374
      %v376 = vrot.slane %v333, 1
      %v377 = vrot.slane %v334, 1
      %v378 = vsel %vm357, %v376, %v377
      %v379 = vrot.slane %v335, 1
      %v380 = vrot.slane %v336, 1
      %v381 = vsel %vm357, %v379, %v380
      %382 = vrot.lane.b32.xlu0 %v360, 4
      %v383 = vpop.permute.xlu0 %382
      %384 = vrot.lane.b32.xlu0 %v363, 4
      %v385 = vpop.permute.xlu0 %384
      %386 = vrot.lane.b32.xlu0 %v366, 4
      %v387 = vpop.permute.xlu0 %386
      %388 = vrot.lane.b32.xlu0 %v369, 4
      %v389 = vpop.permute.xlu0 %388
      %390 = vrot.lane.b32.xlu0 %v372, 4
      %v391 = vpop.permute.xlu0 %390
      %392 = vrot.lane.b32.xlu0 %v375, 4
      %v393 = vpop.permute.xlu0 %392
      %394 = vrot.lane.b32.xlu0 %v378, 4
      %v395 = vpop.permute.xlu0 %394
      %396 = vrot.lane.b32.xlu0 %v381, 4
      %v397 = vpop.permute.xlu0 %396
      %vm406 = vcmask 1045504
      %v407 = vrot.slane %v321, 2
      %v408 = vrot.slane %v322, 2
      %v409 = vsel %vm406, %v407, %v408
      %v410 = vrot.slane %v323, 2
      %v411 = vrot.slane %v324, 2
      %v412 = vsel %vm406, %v410, %v411
      %v413 = vrot.slane %v325, 2
      %v414 = vrot.slane %v326, 2
      %v415 = vsel %vm406, %v413, %v414
      %v416 = vrot.slane %v327, 2
      %v417 = vrot.slane %v328, 2
      %v418 = vsel %vm406, %v416, %v417
      %v419 = vrot.slane %v329, 2
      %v420 = vrot.slane %v330, 2
      %v421 = vsel %vm406, %v419, %v420
      %v422 = vrot.slane %v331, 2
      %v423 = vrot.slane %v332, 2
      %v424 = vsel %vm406, %v422, %v423
      %v425 = vrot.slane %v333, 2
      %v426 = vrot.slane %v334, 2
      %v427 = vsel %vm406, %v425, %v426
      %v428 = vrot.slane %v335, 2
      %v429 = vrot.slane %v336, 2
      %v430 = vsel %vm406, %v428, %v429
      %431 = vrot.lane.b32.xlu0 %v409, 8
      %v432 = vpop.permute.xlu0 %431
      %433 = vrot.lane.b32.xlu0 %v412, 8
      %v434 = vpop.permute.xlu0 %433
      %435 = vrot.lane.b32.xlu0 %v415, 8
      %v436 = vpop.permute.xlu0 %435
      %437 = vrot.lane.b32.xlu0 %v418, 8
      %v438 = vpop.permute.xlu0 %437
      %439 = vrot.lane.b32.xlu0 %v421, 8
      %v440 = vpop.permute.xlu0 %439
      %441 = vrot.lane.b32.xlu0 %v424, 8
      %v442 = vpop.permute.xlu0 %441
      %443 = vrot.lane.b32.xlu0 %v427, 8
      %v444 = vpop.permute.xlu0 %443
      %445 = vrot.lane.b32.xlu0 %v430, 8
      %v446 = vpop.permute.xlu0 %445
      %456 = vrot.lane.b32.xlu0 %v323, 12
      %v457 = vpop.permute.xlu0 %456
      %458 = vrot.lane.b32.xlu0 %v325, 12
      %v459 = vpop.permute.xlu0 %458
      %460 = vrot.lane.b32.xlu0 %v327, 12
      %v461 = vpop.permute.xlu0 %460
      %462 = vrot.lane.b32.xlu0 %v329, 12
      %v463 = vpop.permute.xlu0 %462
      %464 = vrot.lane.b32.xlu0 %v331, 12
      %v465 = vpop.permute.xlu0 %464
      %466 = vrot.lane.b32.xlu0 %v333, 12
      %v467 = vpop.permute.xlu0 %466
      %468 = vrot.lane.b32.xlu0 %v335, 12
      %v469 = vpop.permute.xlu0 %468
      %470 = vrot.lane.b32.xlu0 %v337, 12
      %v471 = vpop.permute.xlu0 %470
      %v481 = vrot.slane %v337, 1
      %v482 = vrot.slane %v338, 1
      %v483 = vsel %vm357, %v481, %v482
      %484 = vrot.lane.b32.xlu0 %v363, 16
      %v485 = vpop.permute.xlu0 %484
      %486 = vrot.lane.b32.xlu0 %v366, 16
      %v487 = vpop.permute.xlu0 %486
      %488 = vrot.lane.b32.xlu0 %v369, 16
      %v489 = vpop.permute.xlu0 %488
      %490 = vrot.lane.b32.xlu0 %v372, 16
      %v491 = vpop.permute.xlu0 %490
      %492 = vrot.lane.b32.xlu0 %v375, 16
      %v493 = vpop.permute.xlu0 %492
      %494 = vrot.lane.b32.xlu0 %v378, 16
      %v495 = vpop.permute.xlu0 %494
      %496 = vrot.lane.b32.xlu0 %v381, 16
      %v497 = vpop.permute.xlu0 %496
      %498 = vrot.lane.b32.xlu0 %v483, 16
      %v499 = vpop.permute.xlu0 %498
      %v508 = vrot.slane %v337, 2
      %v509 = vrot.slane %v338, 2
      %v510 = vsel %vm406, %v508, %v509
      %511 = vrot.lane.b32.xlu0 %v412, 20
      %v512 = vpop.permute.xlu0 %511
      %513 = vrot.lane.b32.xlu0 %v415, 20
      %v514 = vpop.permute.xlu0 %513
      %515 = vrot.lane.b32.xlu0 %v418, 20
      %v516 = vpop.permute.xlu0 %515
      %517 = vrot.lane.b32.xlu0 %v421, 20
      %v518 = vpop.permute.xlu0 %517
      %519 = vrot.lane.b32.xlu0 %v424, 20
      %v520 = vpop.permute.xlu0 %519
      %521 = vrot.lane.b32.xlu0 %v427, 20
      %v522 = vpop.permute.xlu0 %521
      %523 = vrot.lane.b32.xlu0 %v430, 20
      %v524 = vpop.permute.xlu0 %523
      %525 = vrot.lane.b32.xlu0 %v510, 20
      %v526 = vpop.permute.xlu0 %525
      %536 = vrot.lane.b32.xlu0 %v325, 24
      %v537 = vpop.permute.xlu0 %536
      %538 = vrot.lane.b32.xlu0 %v327, 24
      %v539 = vpop.permute.xlu0 %538
      %540 = vrot.lane.b32.xlu0 %v329, 24
      %v541 = vpop.permute.xlu0 %540
      %542 = vrot.lane.b32.xlu0 %v331, 24
      %v543 = vpop.permute.xlu0 %542
      %544 = vrot.lane.b32.xlu0 %v333, 24
      %v545 = vpop.permute.xlu0 %544
      %546 = vrot.lane.b32.xlu0 %v335, 24
      %v547 = vpop.permute.xlu0 %546
      %548 = vrot.lane.b32.xlu0 %v337, 24
      %v549 = vpop.permute.xlu0 %548
      %550 = vrot.lane.b32.xlu0 %v339, 24
      %v551 = vpop.permute.xlu0 %550
      %v561 = vrot.slane %v339, 1
      %v562 = vrot.slane %v340, 1
      %v563 = vsel %vm357, %v561, %v562
      %564 = vrot.lane.b32.xlu0 %v366, 28
      %v565 = vpop.permute.xlu0 %564
      %566 = vrot.lane.b32.xlu0 %v369, 28
      %v567 = vpop.permute.xlu0 %566
      %568 = vrot.lane.b32.xlu0 %v372, 28
      %v569 = vpop.permute.xlu0 %568
      %570 = vrot.lane.b32.xlu0 %v375, 28
      %v571 = vpop.permute.xlu0 %570
      %572 = vrot.lane.b32.xlu0 %v378, 28
      %v573 = vpop.permute.xlu0 %572
      %574 = vrot.lane.b32.xlu0 %v381, 28
      %v575 = vpop.permute.xlu0 %574
      %576 = vrot.lane.b32.xlu0 %v483, 28
      %v577 = vpop.permute.xlu0 %576
      %578 = vrot.lane.b32.xlu0 %v563, 28
      %v579 = vpop.permute.xlu0 %578
      %v588 = vrot.slane %v339, 2
      %v589 = vrot.slane %v340, 2
      %v590 = vsel %vm406, %v588, %v589
      %591 = vrot.lane.b32.xlu0 %v415, 32
      %v592 = vpop.permute.xlu0 %591
      %593 = vrot.lane.b32.xlu0 %v418, 32
      %v594 = vpop.permute.xlu0 %593
      %595 = vrot.lane.b32.xlu0 %v421, 32
      %v596 = vpop.permute.xlu0 %595
      %597 = vrot.lane.b32.xlu0 %v424, 32
      %v598 = vpop.permute.xlu0 %597
      %599 = vrot.lane.b32.xlu0 %v427, 32
      %v600 = vpop.permute.xlu0 %599
      %601 = vrot.lane.b32.xlu0 %v430, 32
      %v602 = vpop.permute.xlu0 %601
      %603 = vrot.lane.b32.xlu0 %v510, 32
      %v604 = vpop.permute.xlu0 %603
      %605 = vrot.lane.b32.xlu0 %v590, 32
      %v606 = vpop.permute.xlu0 %605
      %v615 = vsel %vm288, %v321, %v383
      %v616 = vsel %vm288, %v323, %v385
      %v617 = vsel %vm288, %v325, %v387
      %v618 = vsel %vm288, %v327, %v389
      %v619 = vsel %vm288, %v329, %v391
      %v620 = vsel %vm288, %v331, %v393
      %v621 = vsel %vm288, %v333, %v395
      %v622 = vsel %vm288, %v335, %v397
      %vm623 = vcmask 64512
      %v624 = vsel %vm623, %v615, %v432
      %v625 = vsel %vm623, %v616, %v434
      %v626 = vsel %vm623, %v617, %v436
      %v627 = vsel %vm623, %v618, %v438
      %v628 = vsel %vm623, %v619, %v440
      %v629 = vsel %vm623, %v620, %v442
      %v630 = vsel %vm623, %v621, %v444
      %v631 = vsel %vm623, %v622, %v446
      %vm632 = vcmask 97280
      %v633 = vsel %vm632, %v624, %v457
      %v634 = vsel %vm632, %v625, %v459
      %v635 = vsel %vm632, %v626, %v461
      %v636 = vsel %vm632, %v627, %v463
      %v637 = vsel %vm632, %v628, %v465
      %v638 = vsel %vm632, %v629, %v467
      %v639 = vsel %vm632, %v630, %v469
      %v640 = vsel %vm632, %v631, %v471
      %vm641 = vcmask 130048
      %v642 = vsel %vm641, %v633, %v485
      %v643 = vsel %vm641, %v634, %v487
      %v644 = vsel %vm641, %v635, %v489
      %v645 = vsel %vm641, %v636, %v491
      %v646 = vsel %vm641, %v637, %v493
      %v647 = vsel %vm641, %v638, %v495
      %v648 = vsel %vm641, %v639, %v497
      %v649 = vsel %vm641, %v640, %v499
      %vm650 = vcmask 162816
      %v651 = vsel %vm650, %v642, %v512
      %v652 = vsel %vm650, %v643, %v514
      %v653 = vsel %vm650, %v644, %v516
      %v654 = vsel %vm650, %v645, %v518
      %v655 = vsel %vm650, %v646, %v520
      %v656 = vsel %vm650, %v647, %v522
      %v657 = vsel %vm650, %v648, %v524
      %v658 = vsel %vm650, %v649, %v526
      %vm659 = vcmask 195584
      %v660 = vsel %vm659, %v651, %v537
      %v661 = vsel %vm659, %v652, %v539
      %v662 = vsel %vm659, %v653, %v541
      %v663 = vsel %vm659, %v654, %v543
      %v664 = vsel %vm659, %v655, %v545
      %v665 = vsel %vm659, %v656, %v547
      %v666 = vsel %vm659, %v657, %v549
      %v667 = vsel %vm659, %v658, %v551
      %vm668 = vcmask 228352
      %v669 = vsel %vm668, %v660, %v565
      %v670 = vsel %vm668, %v661, %v567
      %v671 = vsel %vm668, %v662, %v569
      %v672 = vsel %vm668, %v663, %v571
      %v673 = vsel %vm668, %v664, %v573
      %v674 = vsel %vm668, %v665, %v575
      %v675 = vsel %vm668, %v666, %v577
      %v676 = vsel %vm668, %v667, %v579
      %vm677 = vcmask 261120
      %v678 = vsel %vm677, %v669, %v592
      %v679 = vsel %vm677, %v670, %v594
      %v680 = vsel %vm677, %v671, %v596
      %v681 = vsel %vm677, %v672, %v598
      %v682 = vsel %vm677, %v673, %v600
      %v683 = vsel %vm677, %v674, %v602
      %v684 = vsel %vm677, %v675, %v604
      %v685 = vsel %vm677, %v676, %v606
      %v686 = vld [vmem:[%s1] sm:$0xff]
      %v687 = vld [vmem:[%s1 + $0x8] sm:$0xff]
      %v688 = vld [vmem:[%s1 + $0x10] sm:$0xff]
      %v689 = vld [vmem:[%s1 + $0x18] sm:$0xff]
      %v690 = vld [vmem:[%s1 + $0x20] sm:$0xf]
      %v691 = vld [vmem:[%s2] sm:$0x1]
      %v693 = vlaneseq
      %v694 = vshrl.u32 %v693, 7
      %v695 = vsub.s32 0, %v694
      %v696 = vrot.slane %v691, %v695
      %vm698 = vcmask 293888
      %v700 = vsel %vm698, %v678, 0
      %v703 = vsel %vm698, %v679, 0
      %v706 = vsel %vm698, %v680, 0
      %v709 = vsel %vm698, %v681, 0
      %v712 = vsel %vm698, %v682, 0
      %v715 = vsel %vm698, %v683, 0
      %v718 = vsel %vm698, %v684, 0
      %v721 = vsel %vm698, %v685, 0
      %vm723 = vcmask 1043456
      %v725 = vsel %vm723, %v690, 0
      %727 = vmatprep.subr.mxu0 0.0
      %728 = vmatpush1.msra.mxu0 0.0
      %729 = vmatprep.subr.mxu0 0.0
      %730 = vmatpush1.msra.mxu0 0.0
      %731 = vmatprep.subr.mxu0 0.0
      %732 = vmatpush1.msra.mxu0 0.0
      %733 = vmatprep.subr.mxu0 0.0
      %734 = vmatpush1.msra.mxu0 0.0
      %735 = vmatprep.subr.mxu0 0.0
      %736 = vmatpush1.msra.mxu0 0.0
      %737 = vmatprep.subr.mxu0 0.0
      %738 = vmatpush1.msra.mxu0 0.0
      %739 = vmatprep.subr.mxu0 0.0
      %740 = vmatpush1.msra.mxu0 0.0
      %741 = vmatprep.subr.mxu0 0.0
      %742 = vmatpush1.msra.mxu0 0.0
      %743 = vmatprep.subr.mxu0 0.0
      %744 = vmatpush1.msra.mxu0 0.0
      %745 = vmatprep.subr.mxu0 0.0
      %746 = vmatpush1.msra.mxu0 0.0
      %747 = vmatprep.subr.mxu0 0.0
      %748 = vmatpush1.msra.mxu0 0.0
      %749 = vmatprep.subr.mxu0 0.0
      %750 = vmatpush1.msra.mxu0 %v725
      %751 = vmatprep.subr.mxu0 0.0
      %752 = vmatpush1.msra.mxu0 %v689
      %753 = vmatprep.subr.mxu0 0.0
      %754 = vmatpush1.msra.mxu0 %v688
      %755 = vmatprep.subr.mxu0 0.0
      %756 = vmatpush1.msra.mxu0 %v687
      %757 = vmatprep.subr.mxu0 0.0
      %758 = vmatpush1.msra.mxu0 %v686
      %759 = vmatprep.subr.mxu0 0.0
      %760 = vmatpush2.msra.mxu0 0.0
      %761 = vmatprep.subr.mxu0 0.0
      %762 = vmatpush2.msra.mxu0 0.0
      %763 = vmatprep.subr.mxu0 0.0
      %764 = vmatpush2.msra.mxu0 0.0
      %765 = vmatprep.subr.mxu0 0.0
      %766 = vmatpush2.msra.mxu0 0.0
      %767 = vmatprep.subr.mxu0 0.0
      %768 = vmatpush2.msra.mxu0 0.0
      %769 = vmatprep.subr.mxu0 0.0
      %770 = vmatpush2.msra.mxu0 0.0
      %771 = vmatprep.subr.mxu0 0.0
      %772 = vmatpush2.msra.mxu0 0.0
      %773 = vmatprep.subr.mxu0 0.0
      %774 = vmatpush2.msra.mxu0 0.0
      %775 = vmatprep.subr.mxu0 0.0
      %776 = vmatpush2.msra.mxu0 0.0
      %777 = vmatprep.subr.mxu0 0.0
      %778 = vmatpush2.msra.mxu0 0.0
      %779 = vmatprep.subr.mxu0 0.0
      %780 = vmatpush2.msra.mxu0 0.0
      %781 = vmatprep.subr.mxu0 0.0
      %782 = vmatpush2.msra.mxu0 0.0
      %783 = vmatprep.subr.mxu0 0.0
      %784 = vmatpush2.msra.mxu0 0.0
      %785 = vmatprep.subr.mxu0 0.0
      %786 = vmatpush2.msra.mxu0 0.0
      %787 = vmatprep.subr.mxu0 0.0
      %788 = vmatpush2.msra.mxu0 0.0
      %789 = vmatprep.subr.mxu0 0.0
      %790 = vmatpush2.msra.mxu0 0.0
      %791 = vmatprep.mubr.f32.mxu0 0.0
      %792 = vmatmul.mubr.f32.gmra.mxu0 %v700
      %v793 = vpop.f32.mrf.mxu0
      %v794 = vadd.f32 %v696, %v793
      %v795 = vpop.f32.mrf.mxu0
      %796 = vmatprep.mubr.f32.mxu0 0.0
      %797 = vmatmul.mubr.f32.gmra.mxu0 %v703
      %v798 = vpop.f32.mrf.mxu0
      %v799 = vadd.f32 %v696, %v798
      %v800 = vpop.f32.mrf.mxu0
      %801 = vmatprep.mubr.f32.mxu0 0.0
      %802 = vmatmul.mubr.f32.gmra.mxu0 %v706
      %v803 = vpop.f32.mrf.mxu0
      %v804 = vadd.f32 %v696, %v803
      %v805 = vpop.f32.mrf.mxu0
      %806 = vmatprep.mubr.f32.mxu0 0.0
      %807 = vmatmul.mubr.f32.gmra.mxu0 %v709
      %v808 = vpop.f32.mrf.mxu0
      %v809 = vadd.f32 %v696, %v808
      %v810 = vpop.f32.mrf.mxu0
      %811 = vmatprep.mubr.f32.mxu0 0.0
      %812 = vmatmul.mubr.f32.gmra.mxu0 %v712
      %v813 = vpop.f32.mrf.mxu0
      %v814 = vadd.f32 %v696, %v813
      %v815 = vpop.f32.mrf.mxu0
      %816 = vmatprep.mubr.f32.mxu0 0.0
      %817 = vmatmul.mubr.f32.gmra.mxu0 %v715
      %v818 = vpop.f32.mrf.mxu0
      %v819 = vadd.f32 %v696, %v818
      %v820 = vpop.f32.mrf.mxu0
      %821 = vmatprep.mubr.f32.mxu0 0.0
      %822 = vmatmul.mubr.f32.gmra.mxu0 %v718
      %v823 = vpop.f32.mrf.mxu0
      %v824 = vadd.f32 %v696, %v823
      %v825 = vpop.f32.mrf.mxu0
      %826 = vmatprep.mubr.f32.mxu0 0.0
      %827 = vmatmul.mubr.f32.gmra.mxu0 %v721
      %v828 = vpop.f32.mrf.mxu0
      %v829 = vadd.f32 %v696, %v828
      %v830 = vpop.f32.mrf.mxu0
      %831 = vdwg.mxu0
      %v832 = vmax.f32 %v794, 0.0
      %v833 = vmax.f32 %v799, 0.0
      %v834 = vmax.f32 %v804, 0.0
      %v835 = vmax.f32 %v809, 0.0
      %v836 = vmax.f32 %v814, 0.0
      %v837 = vmax.f32 %v819, 0.0
      %v838 = vmax.f32 %v824, 0.0
      %v839 = vmax.f32 %v829, 0.0
      %840 = vst.msk [vmem:[#allocation3] sm:$0xff] %vm623, 0.0
      %vm841 = vcmask 58368
      %842 = vst.msk [vmem:[#allocation3 + $0x8] sm:$0x3] %vm841, 0.0
      %s843 = scalar_lea.vmem [#allocation3], 144
      %844 = vst.msk [vmem:[%s843] sm:$0xff] %vm623, 0.0
      %845 = vst.msk [vmem:[%s843 + $0x8] sm:$0x3] %vm841, 0.0
      %s846 = scalar_lea.vmem [#allocation3], 16
      %vm847 = vcmask 57344
      %848 = vst.msk [vmem:[%s846] sm:$0x1] %vm847, 0.0
      %849 = vst.msk [vmem:[%s846 + $0x10] sm:$0x1] %vm847, 0.0
      %850 = vst.msk [vmem:[%s846 + $0x20] sm:$0x1] %vm847, 0.0
      %851 = vst.msk [vmem:[%s846 + $0x30] sm:$0x1] %vm847, 0.0
      %852 = vst.msk [vmem:[%s846 + $0x40] sm:$0x1] %vm847, 0.0
      %853 = vst.msk [vmem:[%s846 + $0x50] sm:$0x1] %vm847, 0.0
      %854 = vst.msk [vmem:[%s846 + $0x60] sm:$0x1] %vm847, 0.0
      %855 = vst.msk [vmem:[%s846 + $0x70] sm:$0x1] %vm847, 0.0
      %856 = vst.msk [vmem:[%s846 + $0x9] sm:$0x1] %vm847, 0.0
      %857 = vst.msk [vmem:[%s846 + $0x19] sm:$0x1] %vm847, 0.0
      %858 = vst.msk [vmem:[%s846 + $0x29] sm:$0x1] %vm847, 0.0
      %859 = vst.msk [vmem:[%s846 + $0x39] sm:$0x1] %vm847, 0.0
      %860 = vst.msk [vmem:[%s846 + $0x49] sm:$0x1] %vm847, 0.0
      %861 = vst.msk [vmem:[%s846 + $0x59] sm:$0x1] %vm847, 0.0
      %862 = vst.msk [vmem:[%s846 + $0x69] sm:$0x1] %vm847, 0.0
      %863 = vst.msk [vmem:[%s846 + $0x79] sm:$0x1] %vm847, 0.0
      %864 = vst.msk [vmem:[%s846 + $0x1] sm:$0xff] %vm623, %v832
      %865 = vst.msk [vmem:[%s846 + $0x11] sm:$0xff] %vm623, %v833
      %866 = vst.msk [vmem:[%s846 + $0x21] sm:$0xff] %vm623, %v834
      %867 = vst.msk [vmem:[%s846 + $0x31] sm:$0xff] %vm623, %v835
      %868 = vst.msk [vmem:[%s846 + $0x41] sm:$0xff] %vm623, %v836
      %869 = vst.msk [vmem:[%s846 + $0x51] sm:$0xff] %vm623, %v837
      %870 = vst.msk [vmem:[%s846 + $0x61] sm:$0xff] %vm623, %v838
      %871 = vst.msk [vmem:[%s846 + $0x71] sm:$0xff] %vm623, %v839
      %v872 = vld [vmem:[#allocation3] sm:$0xff]
      %v873 = vld [vmem:[#allocation3 + $0x8] sm:$0x3]
      %v874 = vld [vmem:[#allocation3 + $0x10] sm:$0xff]
      %v875 = vld [vmem:[#allocation3 + $0x18] sm:$0x3]
      %v876 = vld [vmem:[#allocation3 + $0x20] sm:$0xff]
      %v877 = vld [vmem:[#allocation3 + $0x28] sm:$0x3]
      %v878 = vld [vmem:[#allocation3 + $0x30] sm:$0xff]
      %v879 = vld [vmem:[#allocation3 + $0x38] sm:$0x3]
      %v880 = vld [vmem:[#allocation3 + $0x40] sm:$0xff]
      %v881 = vld [vmem:[#allocation3 + $0x48] sm:$0x3]
      %v882 = vld [vmem:[#allocation3 + $0x50] sm:$0xff]
      %v883 = vld [vmem:[#allocation3 + $0x58] sm:$0x3]
      %v884 = vld [vmem:[#allocation3 + $0x60] sm:$0xff]
      %v885 = vld [vmem:[#allocation3 + $0x68] sm:$0x3]
      %v886 = vld [vmem:[#allocation3 + $0x70] sm:$0xff]
      %v887 = vld [vmem:[#allocation3 + $0x78] sm:$0x3]
      %v888 = vld [vmem:[#allocation3 + $0x80] sm:$0xff]
      %v889 = vld [vmem:[#allocation3 + $0x88] sm:$0x3]
      %v890 = vld [vmem:[#allocation3 + $0x90] sm:$0xff]
      %v891 = vld [vmem:[#allocation3 + $0x98] sm:$0x3]
      %v908 = vrot.slane %v872, 1
      %v909 = vrot.slane %v873, 1
      %v910 = vsel %vm357, %v908, %v909
      %v911 = vrot.slane %v874, 1
      %v912 = vrot.slane %v875, 1
      %v913 = vsel %vm357, %v911, %v912
      %v914 = vrot.slane %v876, 1
      %v915 = vrot.slane %v877, 1
      %v916 = vsel %vm357, %v914, %v915
      %v917 = vrot.slane %v878, 1
      %v918 = vrot.slane %v879, 1
      %v919 = vsel %vm357, %v917, %v918
      %v920 = vrot.slane %v880, 1
      %v921 = vrot.slane %v881, 1
      %v922 = vsel %vm357, %v920, %v921
      %v923 = vrot.slane %v882, 1
      %v924 = vrot.slane %v883, 1
      %v925 = vsel %vm357, %v923, %v924
      %v926 = vrot.slane %v884, 1
      %v927 = vrot.slane %v885, 1
      %v928 = vsel %vm357, %v926, %v927
      %v929 = vrot.slane %v886, 1
      %v930 = vrot.slane %v887, 1
      %v931 = vsel %vm357, %v929, %v930
      %932 = vrot.lane.b32.xlu0 %v910, 8
      %v933 = vpop.permute.xlu0 %932
      %934 = vrot.lane.b32.xlu0 %v913, 8
      %v935 = vpop.permute.xlu0 %934
      %936 = vrot.lane.b32.xlu0 %v916, 8
      %v937 = vpop.permute.xlu0 %936
      %938 = vrot.lane.b32.xlu0 %v919, 8
      %v939 = vpop.permute.xlu0 %938
      %940 = vrot.lane.b32.xlu0 %v922, 8
      %v941 = vpop.permute.xlu0 %940
      %942 = vrot.lane.b32.xlu0 %v925, 8
      %v943 = vpop.permute.xlu0 %942
      %944 = vrot.lane.b32.xlu0 %v928, 8
      %v945 = vpop.permute.xlu0 %944
      %946 = vrot.lane.b32.xlu0 %v931, 8
      %v947 = vpop.permute.xlu0 %946
      %v956 = vrot.slane %v872, 2
      %v957 = vrot.slane %v873, 2
      %v958 = vsel %vm406, %v956, %v957
      %v959 = vrot.slane %v874, 2
      %v960 = vrot.slane %v875, 2
      %v961 = vsel %vm406, %v959, %v960
      %v962 = vrot.slane %v876, 2
      %v963 = vrot.slane %v877, 2
      %v964 = vsel %vm406, %v962, %v963
      %v965 = vrot.slane %v878, 2
      %v966 = vrot.slane %v879, 2
      %v967 = vsel %vm406, %v965, %v966
      %v968 = vrot.slane %v880, 2
      %v969 = vrot.slane %v881, 2
      %v970 = vsel %vm406, %v968, %v969
      %v971 = vrot.slane %v882, 2
      %v972 = vrot.slane %v883, 2
      %v973 = vsel %vm406, %v971, %v972
      %v974 = vrot.slane %v884, 2
      %v975 = vrot.slane %v885, 2
      %v976 = vsel %vm406, %v974, %v975
      %v977 = vrot.slane %v886, 2
      %v978 = vrot.slane %v887, 2
      %v979 = vsel %vm406, %v977, %v978
      %980 = vrot.lane.b32.xlu0 %v958, 16
      %v981 = vpop.permute.xlu0 %980
      %982 = vrot.lane.b32.xlu0 %v961, 16
      %v983 = vpop.permute.xlu0 %982
      %984 = vrot.lane.b32.xlu0 %v964, 16
      %v985 = vpop.permute.xlu0 %984
      %986 = vrot.lane.b32.xlu0 %v967, 16
      %v987 = vpop.permute.xlu0 %986
      %988 = vrot.lane.b32.xlu0 %v970, 16
      %v989 = vpop.permute.xlu0 %988
      %990 = vrot.lane.b32.xlu0 %v973, 16
      %v991 = vpop.permute.xlu0 %990
      %992 = vrot.lane.b32.xlu0 %v976, 16
      %v993 = vpop.permute.xlu0 %992
      %994 = vrot.lane.b32.xlu0 %v979, 16
      %v995 = vpop.permute.xlu0 %994
      %1005 = vrot.lane.b32.xlu0 %v874, 24
      %v1006 = vpop.permute.xlu0 %1005
      %1007 = vrot.lane.b32.xlu0 %v876, 24
      %v1008 = vpop.permute.xlu0 %1007
      %1009 = vrot.lane.b32.xlu0 %v878, 24
      %v1010 = vpop.permute.xlu0 %1009
      %1011 = vrot.lane.b32.xlu0 %v880, 24
      %v1012 = vpop.permute.xlu0 %1011
      %1013 = vrot.lane.b32.xlu0 %v882, 24
      %v1014 = vpop.permute.xlu0 %1013
      %1015 = vrot.lane.b32.xlu0 %v884, 24
      %v1016 = vpop.permute.xlu0 %1015
      %1017 = vrot.lane.b32.xlu0 %v886, 24
      %v1018 = vpop.permute.xlu0 %1017
      %1019 = vrot.lane.b32.xlu0 %v888, 24
      %v1020 = vpop.permute.xlu0 %1019
      %v1030 = vrot.slane %v888, 1
      %v1031 = vrot.slane %v889, 1
      %v1032 = vsel %vm357, %v1030, %v1031
      %1033 = vrot.lane.b32.xlu0 %v913, 32
      %v1034 = vpop.permute.xlu0 %1033
      %1035 = vrot.lane.b32.xlu0 %v916, 32
      %v1036 = vpop.permute.xlu0 %1035
      %1037 = vrot.lane.b32.xlu0 %v919, 32
      %v1038 = vpop.permute.xlu0 %1037
      %1039 = vrot.lane.b32.xlu0 %v922, 32
      %v1040 = vpop.permute.xlu0 %1039
      %1041 = vrot.lane.b32.xlu0 %v925, 32
      %v1042 = vpop.permute.xlu0 %1041
      %1043 = vrot.lane.b32.xlu0 %v928, 32
      %v1044 = vpop.permute.xlu0 %1043
      %1045 = vrot.lane.b32.xlu0 %v931, 32
      %v1046 = vpop.permute.xlu0 %1045
      %1047 = vrot.lane.b32.xlu0 %v1032, 32
      %v1048 = vpop.permute.xlu0 %1047
      %v1057 = vrot.slane %v888, 2
      %v1058 = vrot.slane %v889, 2
      %v1059 = vsel %vm406, %v1057, %v1058
      %1060 = vrot.lane.b32.xlu0 %v961, 40
      %v1061 = vpop.permute.xlu0 %1060
      %1062 = vrot.lane.b32.xlu0 %v964, 40
      %v1063 = vpop.permute.xlu0 %1062
      %1064 = vrot.lane.b32.xlu0 %v967, 40
      %v1065 = vpop.permute.xlu0 %1064
      %1066 = vrot.lane.b32.xlu0 %v970, 40
      %v1067 = vpop.permute.xlu0 %1066
      %1068 = vrot.lane.b32.xlu0 %v973, 40
      %v1069 = vpop.permute.xlu0 %1068
      %1070 = vrot.lane.b32.xlu0 %v976, 40
      %v1071 = vpop.permute.xlu0 %1070
      %1072 = vrot.lane.b32.xlu0 %v979, 40
      %v1073 = vpop.permute.xlu0 %1072
      %1074 = vrot.lane.b32.xlu0 %v1059, 40
      %v1075 = vpop.permute.xlu0 %1074
      %1085 = vrot.lane.b32.xlu0 %v876, 48
      %v1086 = vpop.permute.xlu0 %1085
      %1087 = vrot.lane.b32.xlu0 %v878, 48
      %v1088 = vpop.permute.xlu0 %1087
      %1089 = vrot.lane.b32.xlu0 %v880, 48
      %v1090 = vpop.permute.xlu0 %1089
      %1091 = vrot.lane.b32.xlu0 %v882, 48
      %v1092 = vpop.permute.xlu0 %1091
      %1093 = vrot.lane.b32.xlu0 %v884, 48
      %v1094 = vpop.permute.xlu0 %1093
      %1095 = vrot.lane.b32.xlu0 %v886, 48
      %v1096 = vpop.permute.xlu0 %1095
      %1097 = vrot.lane.b32.xlu0 %v888, 48
      %v1098 = vpop.permute.xlu0 %1097
      %1099 = vrot.lane.b32.xlu0 %v890, 48
      %v1100 = vpop.permute.xlu0 %1099
      %v1110 = vrot.slane %v890, 1
      %v1111 = vrot.slane %v891, 1
      %v1112 = vsel %vm357, %v1110, %v1111
      %1113 = vrot.lane.b32.xlu0 %v916, 56
      %v1114 = vpop.permute.xlu0 %1113
      %1115 = vrot.lane.b32.xlu0 %v919, 56
      %v1116 = vpop.permute.xlu0 %1115
      %1117 = vrot.lane.b32.xlu0 %v922, 56
      %v1118 = vpop.permute.xlu0 %1117
      %1119 = vrot.lane.b32.xlu0 %v925, 56
      %v1120 = vpop.permute.xlu0 %1119
      %1121 = vrot.lane.b32.xlu0 %v928, 56
      %v1122 = vpop.permute.xlu0 %1121
      %1123 = vrot.lane.b32.xlu0 %v931, 56
      %v1124 = vpop.permute.xlu0 %1123
      %1125 = vrot.lane.b32.xlu0 %v1032, 56
      %v1126 = vpop.permute.xlu0 %1125
      %1127 = vrot.lane.b32.xlu0 %v1112, 56
      %v1128 = vpop.permute.xlu0 %1127
      %v1137 = vrot.slane %v890, 2
      %v1138 = vrot.slane %v891, 2
      %v1139 = vsel %vm406, %v1137, %v1138
      %1140 = vrot.lane.b32.xlu0 %v964, 64
      %v1141 = vpop.permute.xlu0 %1140
      %1142 = vrot.lane.b32.xlu0 %v967, 64
      %v1143 = vpop.permute.xlu0 %1142
      %1144 = vrot.lane.b32.xlu0 %v970, 64
      %v1145 = vpop.permute.xlu0 %1144
      %1146 = vrot.lane.b32.xlu0 %v973, 64
      %v1147 = vpop.permute.xlu0 %1146
      %1148 = vrot.lane.b32.xlu0 %v976, 64
      %v1149 = vpop.permute.xlu0 %1148
      %1150 = vrot.lane.b32.xlu0 %v979, 64
      %v1151 = vpop.permute.xlu0 %1150
      %1152 = vrot.lane.b32.xlu0 %v1059, 64
      %v1153 = vpop.permute.xlu0 %1152
      %1154 = vrot.lane.b32.xlu0 %v1139, 64
      %v1155 = vpop.permute.xlu0 %1154
      %v1164 = vsel %vm623, %v872, %v933
      %v1165 = vsel %vm623, %v874, %v935
      %v1166 = vsel %vm623, %v876, %v937
      %v1167 = vsel %vm623, %v878, %v939
      %v1168 = vsel %vm623, %v880, %v941
      %v1169 = vsel %vm623, %v882, %v943
      %v1170 = vsel %vm623, %v884, %v945
      %v1171 = vsel %vm623, %v886, %v947
      %v1172 = vsel %vm641, %v1164, %v981
      %v1173 = vsel %vm641, %v1165, %v983
      %v1174 = vsel %vm641, %v1166, %v985
      %v1175 = vsel %vm641, %v1167, %v987
      %v1176 = vsel %vm641, %v1168, %v989
      %v1177 = vsel %vm641, %v1169, %v991
      %v1178 = vsel %vm641, %v1170, %v993
      %v1179 = vsel %vm641, %v1171, %v995
      %v1180 = vsel %vm659, %v1172, %v1006
      %v1181 = vsel %vm659, %v1173, %v1008
      %v1182 = vsel %vm659, %v1174, %v1010
      %v1183 = vsel %vm659, %v1175, %v1012
      %v1184 = vsel %vm659, %v1176, %v1014
      %v1185 = vsel %vm659, %v1177, %v1016
      %v1186 = vsel %vm659, %v1178, %v1018
      %v1187 = vsel %vm659, %v1179, %v1020
      %v1188 = vsel %vm677, %v1180, %v1034
      %v1189 = vsel %vm677, %v1181, %v1036
      %v1190 = vsel %vm677, %v1182, %v1038
      %v1191 = vsel %vm677, %v1183, %v1040
      %v1192 = vsel %vm677, %v1184, %v1042
      %v1193 = vsel %vm677, %v1185, %v1044
      %v1194 = vsel %vm677, %v1186, %v1046
      %v1195 = vsel %vm677, %v1187, %v1048
      %vm1196 = vcmask 326656
      %v1197 = vsel %vm1196, %v1188, %v1061
      %v1198 = vsel %vm1196, %v1189, %v1063
      %v1199 = vsel %vm1196, %v1190, %v1065
      %v1200 = vsel %vm1196, %v1191, %v1067
      %v1201 = vsel %vm1196, %v1192, %v1069
      %v1202 = vsel %vm1196, %v1193, %v1071
      %v1203 = vsel %vm1196, %v1194, %v1073
      %v1204 = vsel %vm1196, %v1195, %v1075
      %vm1205 = vcmask 392192
      %v1206 = vsel %vm1205, %v1197, %v1086
      %v1207 = vsel %vm1205, %v1198, %v1088
      %v1208 = vsel %vm1205, %v1199, %v1090
      %v1209 = vsel %vm1205, %v1200, %v1092
      %v1210 = vsel %vm1205, %v1201, %v1094
      %v1211 = vsel %vm1205, %v1202, %v1096
      %v1212 = vsel %vm1205, %v1203, %v1098
      %v1213 = vsel %vm1205, %v1204, %v1100
      %vm1214 = vcmask 457728
      %v1215 = vsel %vm1214, %v1206, %v1114
      %v1216 = vsel %vm1214, %v1207, %v1116
      %v1217 = vsel %vm1214, %v1208, %v1118
      %v1218 = vsel %vm1214, %v1209, %v1120
      %v1219 = vsel %vm1214, %v1210, %v1122
      %v1220 = vsel %vm1214, %v1211, %v1124
      %v1221 = vsel %vm1214, %v1212, %v1126
      %v1222 = vsel %vm1214, %v1213, %v1128
      %vm1223 = vcmask 523264
      %v1224 = vsel %vm1223, %v1215, %v1141
      %v1225 = vsel %vm1223, %v1216, %v1143
      %v1226 = vsel %vm1223, %v1217, %v1145
      %v1227 = vsel %vm1223, %v1218, %v1147
      %v1228 = vsel %vm1223, %v1219, %v1149
      %v1229 = vsel %vm1223, %v1220, %v1151
      %v1230 = vsel %vm1223, %v1221, %v1153
      %v1231 = vsel %vm1223, %v1222, %v1155
      %v1232 = vld [vmem:[%s3] sm:$0xff]
      %v1233 = vld [vmem:[%s4] sm:$0xff]
      %1235 = vset.pattern.permute.xlu0 0
      %1236 = vperm.xlu0 %1235, %v1233
      %v1237 = vpop.permute.xlu0 %1236
      %vm1239 = vcmask 588800
      %v1241 = vsel %vm1239, %v1232, 0
      %v1244 = vsel %vm1239, %v1224, 0
      %v1247 = vsel %vm1239, %v1225, 0
      %v1250 = vsel %vm1239, %v1226, 0
      %v1253 = vsel %vm1239, %v1227, 0
      %v1256 = vsel %vm1239, %v1228, 0
      %v1259 = vsel %vm1239, %v1229, 0
      %v1262 = vsel %vm1239, %v1230, 0
      %v1265 = vsel %vm1239, %v1231, 0
      %1267 = vmatprep.subr.mxu0 0.0
      %1268 = vmatpush1.xpose.msra.mxu0 0.0
      %1269 = vmatprep.subr.mxu0 0.0
      %1270 = vmatpush1.xpose.msra.mxu0 0.0
      %1271 = vmatprep.subr.mxu0 0.0
      %1272 = vmatpush1.xpose.msra.mxu0 0.0
      %1273 = vmatprep.subr.mxu0 0.0
      %1274 = vmatpush1.xpose.msra.mxu0 0.0
      %1275 = vmatprep.subr.mxu0 0.0
      %1276 = vmatpush1.xpose.msra.mxu0 0.0
      %1277 = vmatprep.subr.mxu0 0.0
      %1278 = vmatpush1.xpose.msra.mxu0 0.0
      %1279 = vmatprep.subr.mxu0 0.0
      %1280 = vmatpush1.xpose.msra.mxu0 0.0
      %1281 = vmatprep.subr.mxu0 0.0
      %1282 = vmatpush1.xpose.msra.mxu0 0.0
      %1283 = vmatprep.subr.mxu0 0.0
      %1284 = vmatpush1.xpose.msra.mxu0 %v1265
      %1285 = vmatprep.subr.mxu0 0.0
      %1286 = vmatpush1.xpose.msra.mxu0 %v1262
      %1287 = vmatprep.subr.mxu0 0.0
      %1288 = vmatpush1.xpose.msra.mxu0 %v1259
      %1289 = vmatprep.subr.mxu0 0.0
      %1290 = vmatpush1.xpose.msra.mxu0 %v1256
      %1291 = vmatprep.subr.mxu0 0.0
      %1292 = vmatpush1.xpose.msra.mxu0 %v1253
      %1293 = vmatprep.subr.mxu0 0.0
      %1294 = vmatpush1.xpose.msra.mxu0 %v1250
      %1295 = vmatprep.subr.mxu0 0.0
      %1296 = vmatpush1.xpose.msra.mxu0 %v1247
      %1297 = vmatprep.subr.mxu0 0.0
      %1298 = vmatpush1.xpose.msra.mxu0 %v1244
      %1299 = vmatprep.subr.mxu0 0.0
      %1300 = vmatpush2.xpose.msra.mxu0 0.0
      %1301 = vmatprep.subr.mxu0 0.0
      %1302 = vmatpush2.xpose.msra.mxu0 0.0
      %1303 = vmatprep.subr.mxu0 0.0
      %1304 = vmatpush2.xpose.msra.mxu0 0.0
      %1305 = vmatprep.subr.mxu0 0.0
      %1306 = vmatpush2.xpose.msra.mxu0 0.0
      %1307 = vmatprep.subr.mxu0 0.0
      %1308 = vmatpush2.xpose.msra.mxu0 0.0
      %1309 = vmatprep.subr.mxu0 0.0
      %1310 = vmatpush2.xpose.msra.mxu0 0.0
      %1311 = vmatprep.subr.mxu0 0.0
      %1312 = vmatpush2.xpose.msra.mxu0 0.0
      %1313 = vmatprep.subr.mxu0 0.0
      %1314 = vmatpush2.xpose.msra.mxu0 0.0
      %1315 = vmatprep.subr.mxu0 0.0
      %1316 = vmatpush2.xpose.msra.mxu0 0.0
      %1317 = vmatprep.subr.mxu0 0.0
      %1318 = vmatpush2.xpose.msra.mxu0 0.0
      %1319 = vmatprep.subr.mxu0 0.0
      %1320 = vmatpush2.xpose.msra.mxu0 0.0
      %1321 = vmatprep.subr.mxu0 0.0
      %1322 = vmatpush2.xpose.msra.mxu0 0.0
      %1323 = vmatprep.subr.mxu0 0.0
      %1324 = vmatpush2.xpose.msra.mxu0 0.0
      %1325 = vmatprep.subr.mxu0 0.0
      %1326 = vmatpush2.xpose.msra.mxu0 0.0
      %1327 = vmatprep.subr.mxu0 0.0
      %1328 = vmatpush2.xpose.msra.mxu0 0.0
      %1329 = vmatprep.subr.mxu0 0.0
      %1330 = vmatpush2.xpose.msra.mxu0 0.0
      %1331 = vmatprep.mubr.f32.mxu0 0.0
      %1332 = vmatmul.mubr.f32.gmra.mxu0 %v1241
      %v1333 = vpop.f32.mrf.mxu0
      %v1334 = vadd.f32 %v1237, %v1333
      %v1335 = vpop.f32.mrf.mxu0
      %1336 = vdwg.mxu0
      %v1337 = vmax.f32 %v1334, 0.0
      %1338 = vst.msk [vmem:[%s222] sm:$0xff] %vm1223, %v1337
      %p1339 = scmp.lt.s32.totalorder %s16, 1
      %s1340 = scalar_select %p1339, %s16, 1
      %s1341 = smul.addr %s1340, 8
      %s1342 = scalar_lea.vmem %s5, %s1341
      // Predicated region
      $region41: #{down_forward.1} parent=39 // pred_check
        %p1343 = pneg %p144
      $region42: #{down_forward.1} parent=39 // pred_check_branch
        %1345 = sbr.rel (%p1343) target = $region44
      $region43: #{down_forward.1} parent=39 // pred_region
        _
      $region44: #{down_forward.1} parent=39 // pred_fallthru
        _
    $region40: #{down_forward.1} parent=5 // pred_fallthru
      _
    %p1346 = scmp.le.s32.totalorder 2, %s11
    // Predicated region
    $region45: #{down_forward.1} parent=5 // pred_check
      %p1347 = pneg %p1346
    $region46: #{down_forward.1} parent=5 // pred_check_branch
      %1349 = sbr.rel (%p1347) target = $region48
    $region47: #{down_forward.1} parent=5 // pred_region
      %s1350 = ssub.s32 %s11, 2
      // Predicated region
      $region49: #{down_forward.1} parent=47 // pred_check
        %p1351 = pneg %p150
      $region50: #{down_forward.1} parent=47 // pred_check_branch
        %1353 = sbr.rel (%p1351) target = $region52
      $region51: #{down_forward.1} parent=47 // pred_region
        %p1354 = scmp.lt.s32.totalorder %s17, 1
        %s1355 = scalar_select %p1354, %s17, 1
        %s1356 = smul.addr %s1355, 8
        %s1357 = scalar_lea.vmem %s5, %s1356
      $region52: #{down_forward.1} parent=47 // pred_fallthru
        _
    $region48: #{down_forward.1} parent=5 // pred_fallthru
      _
  $region6: #{down_forward.1} parent=0 // loop_footer
    %s15 = sadd.s32 1, %s11
  $region7: #{down_forward.1} parent=0 // loop_footer_branch
    %10 = sbr.rel target = $region3
  $region8: #{down_forward.1} parent=0 // loop_exit
    _

</llo_original>
